<compile_context>
chip_gen: v7x
topology: tpu7x:2x2x1
jax: 0.10.0
libtpu: 0.0.40
codegen_flags: <defaults>
</compile_context>

<pallas_src>
import functools

import jax
import jax.numpy as jnp
from jax.experimental import pallas as pl
from jax.experimental.pallas import tpu as pltpu

IGNORE_INDEX = -100


def _round_up(x, m):
    return ((x + m - 1) // m) * m


def _ce_kernel(labels_ref, logits_ref, loss_ref, m_sc, l_sc, t_sc, *, vocab_size):
    j = pl.program_id(1)
    tv = logits_ref.shape[1]

    @pl.when(j == 0)
    def _():
        m_sc[...] = jnp.full_like(m_sc, -jnp.inf)
        l_sc[...] = jnp.zeros_like(l_sc)
        t_sc[...] = jnp.zeros_like(t_sc)

    s = logits_ref[...].astype(jnp.float32)            # (TM, TV)
    labels = labels_ref[...]                           # (TM, 1) int32

    local_lane = jax.lax.broadcasted_iota(jnp.int32, s.shape, 1)

    # Mask lanes beyond the true vocab size (only bites in the last vocab tile;
    # skipped entirely at trace time when tv divides V).
    if vocab_size % tv != 0:
        s = jnp.where(local_lane < (vocab_size - j * tv), s, -jnp.inf)

    # Online logsumexp over the vocab axis.
    m_new = jnp.maximum(m_sc[...], s.max(axis=-1, keepdims=True))
    scale = jnp.exp(m_sc[...] - m_new)
    l_sc[...] = scale * l_sc[...] + jnp.exp(s - m_new).sum(axis=-1, keepdims=True)
    m_sc[...] = m_new

    # Target-logit gather: tile-local compare; (labels - j*tv) is a (TM,1) op.
    hit = local_lane == (labels - j * tv)              # at most one True per row
    t_sc[...] += jnp.where(hit, s, 0.0).sum(axis=-1, keepdims=True)

    @pl.when(j == pl.num_programs(1) - 1)
    def _():
        lse = m_sc[...] + jnp.log(l_sc[...])           # (TM, 1)
        per_row = lse - t_sc[...]
        valid = labels != IGNORE_INDEX
        loss_ref[...] = jnp.where(valid, per_row, 0.0)


def copilot_criterion_loss(logits, labels, *, tm=256, tv=2048):
    """Shifted cross-entropy (mean over non-ignored tokens), PyTorch semantics."""
    B, S, V = logits.shape
    assert labels.shape == (B, S)

    # (B, S, V) -> (B*S, V): leading-dim merge of a contiguous array is free.
    flat_logits = logits.reshape(B * S, V)
    N = B * S

    # Shift the *labels* instead of slicing the logits: row (b, s) of the
    # un-shifted logits predicts labels[b, s+1]; position S-1 has no target.
    shift_labels = jnp.concatenate(
        [labels[:, 1:].astype(jnp.int32),
         jnp.full((B, 1), IGNORE_INDEX, jnp.int32)], axis=1).reshape(-1)

    # Tile hygiene: tm multiple of 8 (f32) / 16 (bf16); tv multiple of 128.
    row_mult = 16 if flat_logits.dtype == jnp.bfloat16 else 8
    tm_eff = _round_up(max(row_mult, min(tm, _round_up(N, row_mult))), row_mult)
    tv_eff = _round_up(max(128, min(tv, _round_up(V, 128))), 128)

    # Pad only the (tiny) labels so the per-row output has whole blocks;
    # the logits array is left untouched (partial last row block is fine).
    Np = _round_up(N, tm_eff)
    if Np > N:
        shift_labels = jnp.concatenate(
            [shift_labels, jnp.full((Np - N,), IGNORE_INDEX, jnp.int32)])
    labels2d = shift_labels.reshape(Np, 1)

    grid = (Np // tm_eff, pl.cdiv(V, tv_eff))

    # VMEM budget: ~2x the double-buffered logits block, capped under v7x's
    # 64 MiB physical VMEM; 32 MiB floor is safe on v5e/v6e/v7x.
    block_bytes = tm_eff * tv_eff * jnp.dtype(flat_logits.dtype).itemsize
    vmem_limit = int(min(max(32 << 20, 4 * block_bytes + (2 << 20)), 56 << 20))

    kernel = functools.partial(_ce_kernel, vocab_size=V)

    loss_rows = pl.pallas_call(
        kernel,
        out_shape=jax.ShapeDtypeStruct((Np, 1), jnp.float32),
        grid_spec=pltpu.PrefetchScalarGridSpec(
            num_scalar_prefetch=0,
            grid=grid,
            in_specs=[
                pl.BlockSpec((tm_eff, 1), lambda i, j: (i, 0)),        # labels
                pl.BlockSpec((tm_eff, tv_eff), lambda i, j: (i, j)),   # logits
            ],
            out_specs=pl.BlockSpec((tm_eff, 1), lambda i, j: (i, 0)),
            scratch_shapes=[
                pltpu.VMEM((tm_eff, 1), jnp.float32),  # running max
                pltpu.VMEM((tm_eff, 1), jnp.float32),  # running sum
                pltpu.VMEM((tm_eff, 1), jnp.float32),  # target logit
            ],
        ),
        compiler_params=pltpu.CompilerParams(
            dimension_semantics=("parallel", "arbitrary"),
            vmem_limit_bytes=vmem_limit),
    )(labels2d, flat_logits)

    total = loss_rows.sum()
    # Count of non-ignored targets computed from the tiny labels array
    # (padded rows are IGNORE_INDEX, so they never contribute).
    count = (shift_labels != IGNORE_INDEX).sum().astype(jnp.float32)
    return total / count  # reduction='mean' over non-ignored tokens (NaN if count==0, as in PyTorch)


if __name__ == "__main__":
    key = jax.random.PRNGKey(0)
    B, S, V = 2, 9, 512  # small synthetic shapes; vocab_size := 512
    k1, k2 = jax.random.split(key)
    logits = jax.random.normal(k1, (B, S, V), dtype=jnp.float32)
    labels = jax.random.randint(k2, (B, S), 0, V, dtype=jnp.int32)
    # exercise ignore_index=-100 (default of nn.CrossEntropyLoss)
    labels = labels.at[0, 3].set(IGNORE_INDEX).at[1, 7].set(IGNORE_INDEX)

    loss = copilot_criterion_loss(logits, labels)
    loss = jax.block_until_ready(loss)

    # sanity check against a pure-JAX reference (PyTorch semantics)
    sl = logits[:, :-1, :].reshape(-1, V)
    st = labels[:, 1:].reshape(-1)
    valid = st != IGNORE_INDEX
    lse = jax.nn.logsumexp(sl, axis=-1)
    tgt = jnp.take_along_axis(sl, jnp.clip(st, 0)[:, None], axis=-1)[:, 0]
    ref = jnp.where(valid, lse - tgt, 0.0).sum() / valid.sum()
    assert jnp.allclose(loss, ref, rtol=1e-5, atol=1e-5), (loss, ref)

    print("KERNEL_OK")
</pallas_src>

<mosaic_0001>
module attributes {stable_mosaic.version = 11 : i64} {
  func.func @_ce_kernel(%arg0: i32, %arg1: i32, %arg2: memref<24x1xi32, #tpu.memory_space<vmem>>, %arg3: memref<24x512xf32, #tpu.memory_space<vmem>>, %arg4: memref<24x1xf32, #tpu.memory_space<vmem>>, %arg5: memref<24x1xf32, #tpu.memory_space<vmem>>, %arg6: memref<24x1xf32, #tpu.memory_space<vmem>>, %arg7: memref<24x1xf32, #tpu.memory_space<vmem>>) attributes {dimension_semantics = [#tpu.dimension_semantics<parallel>, #tpu.dimension_semantics<arbitrary>], iteration_bounds = array<i64: 1, 1>, scalar_prefetch = 0 : i64, scratch_operands = 3 : i64, tpu.core_type = #tpu.core_type<tc>, window_params = [{transform_indices = @transform_0, window_bounds = array<i64: 24, 1>}, {transform_indices = @transform_1, window_bounds = array<i64: 24, 512>}, {transform_indices = @transform_2, window_bounds = array<i64: 24, 1>}]} {
    %c0_i32 = arith.constant 0 : i32
    %0 = arith.cmpi eq, %arg1, %c0_i32 : i32
    %1 = arith.extui %0 : i1 to i32
    %c0_i32_0 = arith.constant 0 : i32
    %2 = arith.cmpi ne, %1, %c0_i32_0 : i32
    scf.if %2 {
      %cst_23 = arith.constant 0xFF800000 : f32
      %38 = vector.broadcast %cst_23 : f32 to vector<24x1xf32>
      %c0_24 = arith.constant 0 : index
      %c0_25 = arith.constant 0 : index
      %39 = vector.load %arg5[%c0_24, %c0_25] : memref<24x1xf32, #tpu.memory_space<vmem>>, vector<24x1xf32>
      tpu.vector_store %arg5[%c0_24, %c0_25], %38 {strides = array<i32>} : memref<24x1xf32, #tpu.memory_space<vmem>>, vector<24x1xf32>,
      %cst_26 = arith.constant 0.000000e+00 : f32
      %40 = vector.broadcast %cst_26 : f32 to vector<24x1xf32>
      %c0_27 = arith.constant 0 : index
      %c0_28 = arith.constant 0 : index
      %41 = vector.load %arg6[%c0_27, %c0_28] : memref<24x1xf32, #tpu.memory_space<vmem>>, vector<24x1xf32>
      tpu.vector_store %arg6[%c0_27, %c0_28], %40 {strides = array<i32>} : memref<24x1xf32, #tpu.memory_space<vmem>>, vector<24x1xf32>,
      %cst_29 = arith.constant 0.000000e+00 : f32
      %42 = vector.broadcast %cst_29 : f32 to vector<24x1xf32>
      %c0_30 = arith.constant 0 : index
      %c0_31 = arith.constant 0 : index
      %43 = vector.load %arg7[%c0_30, %c0_31] : memref<24x1xf32, #tpu.memory_space<vmem>>, vector<24x1xf32>
      tpu.vector_store %arg7[%c0_30, %c0_31], %42 {strides = array<i32>} : memref<24x1xf32, #tpu.memory_space<vmem>>, vector<24x1xf32>,
    } else {
    }
    %c0 = arith.constant 0 : index
    %c0_1 = arith.constant 0 : index
    %3 = vector.load %arg3[%c0, %c0_1] : memref<24x512xf32, #tpu.memory_space<vmem>>, vector<24x512xf32>
    %c0_2 = arith.constant 0 : index
    %c0_3 = arith.constant 0 : index
    %4 = vector.load %arg2[%c0_2, %c0_3] : memref<24x1xi32, #tpu.memory_space<vmem>>, vector<24x1xi32>
    %5 = tpu.iota {dimensions = array<i32: 1>} : vector<24x512xi32>
    %c0_4 = arith.constant 0 : index
    %c0_5 = arith.constant 0 : index
    %6 = vector.load %arg5[%c0_4, %c0_5] : memref<24x1xf32, #tpu.memory_space<vmem>>, vector<24x1xf32>
    %cst = arith.constant dense<0xFF800000> : vector<24xf32>
    %7 = vector.multi_reduction <maximumf>, %3, %cst [1] : vector<24x512xf32> to vector<24xf32>
    %8 = vector.shape_cast %7 : vector<24xf32> to vector<24x1xf32>
    %9 = arith.maximumf %6, %8 : vector<24x1xf32>
    %c0_6 = arith.constant 0 : index
    %c0_7 = arith.constant 0 : index
    %10 = vector.load %arg5[%c0_6, %c0_7] : memref<24x1xf32, #tpu.memory_space<vmem>>, vector<24x1xf32>
    %11 = arith.subf %10, %9 : vector<24x1xf32>
    %12 = math.exp %11 : vector<24x1xf32>
    %c0_8 = arith.constant 0 : index
    %c0_9 = arith.constant 0 : index
    %13 = vector.load %arg6[%c0_8, %c0_9] : memref<24x1xf32, #tpu.memory_space<vmem>>, vector<24x1xf32>
    %14 = arith.mulf %12, %13 : vector<24x1xf32>
    %15 = vector.broadcast %9 : vector<24x1xf32> to vector<24x512xf32>
    %16 = arith.subf %3, %15 : vector<24x512xf32>
    %17 = math.exp %16 : vector<24x512xf32>
    %cst_10 = arith.constant dense<0.000000e+00> : vector<24xf32>
    %18 = vector.multi_reduction <add>, %17, %cst_10 [1] : vector<24x512xf32> to vector<24xf32>
    %19 = vector.shape_cast %18 : vector<24xf32> to vector<24x1xf32>
    %20 = arith.addf %14, %19 : vector<24x1xf32>
    %c0_11 = arith.constant 0 : index
    %c0_12 = arith.constant 0 : index
    %21 = vector.load %arg6[%c0_11, %c0_12] : memref<24x1xf32, #tpu.memory_space<vmem>>, vector<24x1xf32>
    tpu.vector_store %arg6[%c0_11, %c0_12], %20 {strides = array<i32>} : memref<24x1xf32, #tpu.memory_space<vmem>>, vector<24x1xf32>,
    %c0_13 = arith.constant 0 : index
    %c0_14 = arith.constant 0 : index
    %22 = vector.load %arg5[%c0_13, %c0_14] : memref<24x1xf32, #tpu.memory_space<vmem>>, vector<24x1xf32>
    tpu.vector_store %arg5[%c0_13, %c0_14], %9 {strides = array<i32>} : memref<24x1xf32, #tpu.memory_space<vmem>>, vector<24x1xf32>,
    %c512_i32 = arith.constant 512 : i32
    %23 = arith.muli %arg1, %c512_i32 : i32
    %24 = vector.broadcast %23 : i32 to vector<24x1xi32>
    %25 = arith.subi %4, %24 : vector<24x1xi32>
    %26 = vector.broadcast %25 : vector<24x1xi32> to vector<24x512xi32>
    %27 = arith.cmpi eq, %5, %26 : vector<24x512xi32>
    %c0_15 = arith.constant 0 : index
    %c0_16 = arith.constant 0 : index
    %28 = vector.load %arg7[%c0_15, %c0_16] : memref<24x1xf32, #tpu.memory_space<vmem>>, vector<24x1xf32>
    %cst_17 = arith.constant 0.000000e+00 : f32
    %29 = vector.broadcast %cst_17 : f32 to vector<24x512xf32>
    %30 = arith.select %27, %3, %29 : vector<24x512xi1>, vector<24x512xf32>
    %cst_18 = arith.constant dense<0.000000e+00> : vector<24xf32>
    %31 = vector.multi_reduction <add>, %30, %cst_18 [1] : vector<24x512xf32> to vector<24xf32>
    %32 = vector.shape_cast %31 : vector<24xf32> to vector<24x1xf32>
    %33 = arith.addf %28, %32 : vector<24x1xf32>
    %c0_19 = arith.constant 0 : index
    %c0_20 = arith.constant 0 : index
    %34 = vector.load %arg7[%c0_19, %c0_20] : memref<24x1xf32, #tpu.memory_space<vmem>>, vector<24x1xf32>
    tpu.vector_store %arg7[%c0_19, %c0_20], %33 {strides = array<i32>} : memref<24x1xf32, #tpu.memory_space<vmem>>, vector<24x1xf32>,
    %c0_i32_21 = arith.constant 0 : i32
    %35 = arith.cmpi eq, %arg1, %c0_i32_21 : i32
    %36 = arith.extui %35 : i1 to i32
    %c0_i32_22 = arith.constant 0 : i32
    %37 = arith.cmpi ne, %36, %c0_i32_22 : i32
    scf.if %37 {
      %c0_23 = arith.constant 0 : index
      %c0_24 = arith.constant 0 : index
      %38 = vector.load %arg5[%c0_23, %c0_24] : memref<24x1xf32, #tpu.memory_space<vmem>>, vector<24x1xf32>
      %c0_25 = arith.constant 0 : index
      %c0_26 = arith.constant 0 : index
      %39 = vector.load %arg6[%c0_25, %c0_26] : memref<24x1xf32, #tpu.memory_space<vmem>>, vector<24x1xf32>
      %40 = math.log %39 : vector<24x1xf32>
      %41 = arith.addf %38, %40 : vector<24x1xf32>
      %c0_27 = arith.constant 0 : index
      %c0_28 = arith.constant 0 : index
      %42 = vector.load %arg7[%c0_27, %c0_28] : memref<24x1xf32, #tpu.memory_space<vmem>>, vector<24x1xf32>
      %43 = arith.subf %41, %42 : vector<24x1xf32>
      %c-100_i32 = arith.constant -100 : i32
      %44 = vector.broadcast %c-100_i32 : i32 to vector<24x1xi32>
      %45 = arith.cmpi ne, %4, %44 : vector<24x1xi32>
      %cst_29 = arith.constant 0.000000e+00 : f32
      %46 = vector.broadcast %cst_29 : f32 to vector<24x1xf32>
      %47 = arith.select %45, %43, %46 : vector<24x1xi1>, vector<24x1xf32>
      %c0_30 = arith.constant 0 : index
      %c0_31 = arith.constant 0 : index
      %48 = vector.load %arg4[%c0_30, %c0_31] : memref<24x1xf32, #tpu.memory_space<vmem>>, vector<24x1xf32>
      tpu.vector_store %arg4[%c0_30, %c0_31], %47 {strides = array<i32>} : memref<24x1xf32, #tpu.memory_space<vmem>>, vector<24x1xf32>,
    } else {
    }
    return
  }
  func.func @transform_0(%arg0: i32, %arg1: i32) -> (i32, i32) {
    %c0_i32 = arith.constant 0 : i32
    %c0_i32_0 = arith.constant 0 : i32
    return %arg0, %c0_i32 : i32, i32
  }
  func.func @transform_1(%arg0: i32, %arg1: i32) -> (i32, i32) {
    %c0_i32 = arith.constant 0 : i32
    return %arg0, %arg1 : i32, i32
  }
  func.func @transform_2(%arg0: i32, %arg1: i32) -> (i32, i32) {
    %c0_i32 = arith.constant 0 : i32
    %c0_i32_0 = arith.constant 0 : i32
    return %arg0, %c0_i32 : i32, i32
  }
}

</mosaic_0001>

<llo_original>
// kernel: tpu_custom_call.1
$region0: #{tpu_custom_call.1}
  #allocation0 [shape = 'u32[]', space=smem, size = 0x4, offset = 0x4, fixed_abs, tag = 'smem constant byte address 0x4 - core index']
  #allocation1 [shape = 'u32[144,128]{1,0:T(1,128)}', space=vmem, size = 0x12000, scoped, tag = 'internal scratch']
  #allocation2 [shape = 'f32[24,1]{1,0:T(8,128)}', space=vmem, size = 0x3000, scoped, tag = 'scratch operand']
  #allocation3 [shape = 'f32[24,1]{1,0:T(8,128)}', space=vmem, size = 0x3000, scoped, tag = 'scratch operand']
  #allocation4 [shape = 'f32[24,1]{1,0:T(8,128)}', space=vmem, size = 0x3000, scoped, tag = 'scratch operand']
  %s0 = inlined_call_operand.vmem [shape: s32[24,1], index: 0, kind: input, shape index: {}]
  %s1 = inlined_call_operand.hbm [shape: f32[18,512], index: 1, kind: input, shape index: {}]
  %s2 = inlined_call_operand.vmem [shape: f32[24,1], index: 2, kind: output, shape index: {}]
  %s3 = sld [smem:[#allocation0]]
  $region30: #{tpu_custom_call.1} parent=0
    _
  %s5 = ssub.s32 1, %s3
  %s6 = scalar_select 0, %s5, %s3
  $region1: #{tpu_custom_call.1} parent=0
    #allocation5 [shape = 'u8[49152]{0}', space=vmem, size = 0xc000, scoped, tag = 'input window, operand 1, single buffered']
    #allocation6 [shape = 's32[1]{0}', space=sflag, size = 0x4, scoped, tag = 'scoped memory for tpu_custom_call.1']
    %7 = vsyncpa [#allocation6], 0
    // Predicated region
    $region2: #{tpu_custom_call.1} parent=1 // pred_check
      _
    $region3: #{tpu_custom_call.1} parent=1 // pred_check_branch
      %9 = sbr.rel (0) target = $region5
    $region4: #{tpu_custom_call.1} parent=1 // pred_region
      _
    $region5: #{tpu_custom_call.1} parent=1 // pred_fallthru
      _
    // Predicated region
    $region6: #{tpu_custom_call.1} parent=1 // pred_check
      _
    $region7: #{tpu_custom_call.1} parent=1 // pred_check_branch
      %11 = sbr.rel (0) target = $region9
    $region8: #{tpu_custom_call.1} parent=1 // pred_region
      %s13 = ssub.s32 1536, 1536
      %14 = vsyncadd [#allocation6], %s13
      %s15 = sshll.u32 [#allocation5], 4
      %s16 = int_to_ptr.vmem [resolvable:$true] %s15
      %21 = dma.hbm_to_vmem [thread:$0]  %s1, 1536, %s16, [#allocation6], 512, 512, 32
    $region9: #{tpu_custom_call.1} parent=1 // pred_fallthru
      _
    // Predicated region
    $region10: #{tpu_custom_call.1} parent=1 // pred_check
      _
    $region11: #{tpu_custom_call.1} parent=1 // pred_check_branch
      %23 = sbr.rel (0) target = $region13
    $region12: #{tpu_custom_call.1} parent=1 // pred_region
      %24 = dma.done [#allocation6], 1536
    $region13: #{tpu_custom_call.1} parent=1 // pred_fallthru
      _
    %p25 = scmp.eq.s32.totalorder 0, 0
    // Predicated region
    $region14: #{tpu_custom_call.1} parent=1 // pred_check
      %p26 = pneg %p25
    $region15: #{tpu_custom_call.1} parent=1 // pred_check_branch
      %28 = sbr.rel (%p26) target = $region17
    $region16: #{tpu_custom_call.1} parent=1 // pred_region
      %vm29 = vcmask 7168
      %30 = vst.msk [vmem:[#allocation2] sm:$0xff] %vm29, -inf
      %31 = vst.msk [vmem:[#allocation2 + $0x8] sm:$0xff] %vm29, -inf
      %32 = vst.msk [vmem:[#allocation2 + $0x10] sm:$0xff] %vm29, -inf
      %33 = vst.msk [vmem:[#allocation3] sm:$0xff] %vm29, 0.0
      %34 = vst.msk [vmem:[#allocation3 + $0x8] sm:$0xff] %vm29, 0.0
      %35 = vst.msk [vmem:[#allocation3 + $0x10] sm:$0xff] %vm29, 0.0
      %36 = vst.msk [vmem:[#allocation4] sm:$0xff] %vm29, 0.0
      %37 = vst.msk [vmem:[#allocation4 + $0x8] sm:$0xff] %vm29, 0.0
      %38 = vst.msk [vmem:[#allocation4 + $0x10] sm:$0xff] %vm29, 0.0
    $region17: #{tpu_custom_call.1} parent=1 // pred_fallthru
      _
    %v39 = vld [vmem:[#allocation5] sm:$0xff]
    %v40 = vld [vmem:[#allocation5 + $0x8] sm:$0xff]
    %v41 = vld [vmem:[#allocation5 + $0x10] sm:$0xff]
    %v42 = vld [vmem:[#allocation5 + $0x18] sm:$0xff]
    %v43 = vld [vmem:[#allocation5 + $0x20] sm:$0xff]
    %v44 = vld [vmem:[#allocation5 + $0x28] sm:$0xff]
    %v45 = vld [vmem:[#allocation5 + $0x30] sm:$0xff]
    %v46 = vld [vmem:[#allocation5 + $0x38] sm:$0xff]
    %v47 = vld [vmem:[#allocation5 + $0x40] sm:$0xff]
    %v48 = vld [vmem:[#allocation5 + $0x48] sm:$0xff]
    %v49 = vld [vmem:[#allocation5 + $0x50] sm:$0xff]
    %v50 = vld [vmem:[#allocation5 + $0x58] sm:$0xff]
    %v51 = vld [vmem:[%s0] sm:$0xff]
    %v52 = vld [vmem:[%s0 + $0x8] sm:$0xff]
    %v53 = vld [vmem:[%s0 + $0x10] sm:$0xff]
    %v54 = vlaneseq
    %v55 = vand.u32 %v54, 127
    %v56 = vadd.s32 %v55, 128
    %v57 = vadd.s32 %v55, 256
    %v58 = vadd.s32 %v55, 384
    %v59 = vld [vmem:[#allocation2] sm:$0xff]
    %v60 = vld [vmem:[#allocation2 + $0x8] sm:$0xff]
    %v61 = vld [vmem:[#allocation2 + $0x10] sm:$0xff]
    %v62 = vmax.f32 %v39, %v41
    %v63 = vmax.f32 %v40, %v42
    %v64 = vmax.f32 %v62, %v63
    %65 = vmax.xlane.f32.xlu0 %v64
    %v66 = vpop.xlane.xlu0 %65
    %v67 = vmax.f32 %v43, %v45
    %v68 = vmax.f32 %v44, %v46
    %v69 = vmax.f32 %v67, %v68
    %70 = vmax.xlane.f32.xlu0 %v69
    %v71 = vpop.xlane.xlu0 %70
    %v72 = vmax.f32 %v47, %v49
    %v73 = vmax.f32 %v48, %v50
    %v74 = vmax.f32 %v72, %v73
    %75 = vmax.xlane.f32.xlu0 %v74
    %v76 = vpop.xlane.xlu0 %75
    %v77 = vmax.f32 %v59, %v66
    %v78 = vmax.f32 %v60, %v71
    %v79 = vmax.f32 %v61, %v76
    %v80 = vsub.f32 %v59, %v77
    %v81 = vsub.f32 %v60, %v78
    %v82 = vsub.f32 %v61, %v79
    %v83 = vmul.f32 %v80, 1.442695
    %v84 = vpow.pop %v83
    %v85 = vmul.f32 %v81, 1.442695
    %v86 = vpow.pop %v85
    %v87 = vmul.f32 %v82, 1.442695
    %v88 = vpow.pop %v87
    %v89 = vld [vmem:[#allocation3] sm:$0xff]
    %v90 = vld [vmem:[#allocation3 + $0x8] sm:$0xff]
    %v91 = vld [vmem:[#allocation3 + $0x10] sm:$0xff]
    %v92 = vmul.f32 %v84, %v89
    %v93 = vmul.f32 %v86, %v90
    %v94 = vmul.f32 %v88, %v91
    %96 = vset.pattern.permute.xlu0 0
    %97 = vperm.xlu0 %96, %v77
    %v98 = vpop.permute.xlu0 %97
    %101 = vset.pattern.permute.xlu0 0
    %102 = vperm.xlu0 %101, %v78
    %v103 = vpop.permute.xlu0 %102
    %106 = vset.pattern.permute.xlu0 0
    %107 = vperm.xlu0 %106, %v79
    %v108 = vpop.permute.xlu0 %107
    %v110 = vsub.f32 %v39, %v98
    %v111 = vsub.f32 %v40, %v98
    %v112 = vsub.f32 %v41, %v98
    %v113 = vsub.f32 %v42, %v98
    %v114 = vsub.f32 %v43, %v103
    %v115 = vsub.f32 %v44, %v103
    %v116 = vsub.f32 %v45, %v103
    %v117 = vsub.f32 %v46, %v103
    %v118 = vsub.f32 %v47, %v108
    %v119 = vsub.f32 %v48, %v108
    %v120 = vsub.f32 %v49, %v108
    %v121 = vsub.f32 %v50, %v108
    %v122 = vmul.f32 %v110, 1.442695
    %v123 = vpow.pop %v122
    %v124 = vmul.f32 %v111, 1.442695
    %v125 = vpow.pop %v124
    %v126 = vmul.f32 %v112, 1.442695
    %v127 = vpow.pop %v126
    %v128 = vmul.f32 %v113, 1.442695
    %v129 = vpow.pop %v128
    %v130 = vmul.f32 %v114, 1.442695
    %v131 = vpow.pop %v130
    %v132 = vmul.f32 %v115, 1.442695
    %v133 = vpow.pop %v132
    %v134 = vmul.f32 %v116, 1.442695
    %v135 = vpow.pop %v134
    %v136 = vmul.f32 %v117, 1.442695
    %v137 = vpow.pop %v136
    %v138 = vmul.f32 %v118, 1.442695
    %v139 = vpow.pop %v138
    %v140 = vmul.f32 %v119, 1.442695
    %v141 = vpow.pop %v140
    %v142 = vmul.f32 %v120, 1.442695
    %v143 = vpow.pop %v142
    %v144 = vmul.f32 %v121, 1.442695
    %v145 = vpow.pop %v144
    %v146 = vadd.f32 %v123, %v125
    %v147 = vadd.f32 %v146, %v127
    %v148 = vadd.f32 %v147, %v129
    %149 = vadd.xlane.f32.xlu0 %v148
    %v150 = vpop.xlane.xlu0 %149
    %v151 = vadd.f32 %v131, %v133
    %v152 = vadd.f32 %v151, %v135
    %v153 = vadd.f32 %v152, %v137
    %154 = vadd.xlane.f32.xlu0 %v153
    %v155 = vpop.xlane.xlu0 %154
    %v156 = vadd.f32 %v139, %v141
    %v157 = vadd.f32 %v156, %v143
    %v158 = vadd.f32 %v157, %v145
    %159 = vadd.xlane.f32.xlu0 %v158
    %v160 = vpop.xlane.xlu0 %159
    %v161 = vadd.f32 %v92, %v150
    %v162 = vadd.f32 %v93, %v155
    %v163 = vadd.f32 %v94, %v160
    %vm164 = vcmask 7168
    %165 = vst.msk [vmem:[#allocation3] sm:$0xff] %vm164, %v161
    %166 = vst.msk [vmem:[#allocation3 + $0x8] sm:$0xff] %vm164, %v162
    %167 = vst.msk [vmem:[#allocation3 + $0x10] sm:$0xff] %vm164, %v163
    %168 = vst.msk [vmem:[#allocation2] sm:$0xff] %vm164, %v77
    %169 = vst.msk [vmem:[#allocation2 + $0x8] sm:$0xff] %vm164, %v78
    %170 = vst.msk [vmem:[#allocation2 + $0x10] sm:$0xff] %vm164, %v79
    %s171 = smul.u32 0, 512
    %v172 = vstv %s171
    %v173 = vsub.s32 %v51, %v172
    %v174 = vsub.s32 %v52, %v172
    %v175 = vsub.s32 %v53, %v172
    %176 = vset.pattern.permute.xlu0 0
    %177 = vperm.xlu0 %176, %v173
    %v178 = vpop.permute.xlu0 %177
    %179 = vset.pattern.permute.xlu0 0
    %180 = vperm.xlu0 %179, %v174
    %v181 = vpop.permute.xlu0 %180
    %182 = vset.pattern.permute.xlu0 0
    %183 = vperm.xlu0 %182, %v175
    %v184 = vpop.permute.xlu0 %183
    %vm185 = vcmp.eq.s32.totalorder %v55, %v178
    %vm186 = vcmp.eq.s32.totalorder %v56, %v178
    %vm187 = vcmp.eq.s32.totalorder %v57, %v178
    %vm188 = vcmp.eq.s32.totalorder %v58, %v178
    %vm189 = vcmp.eq.s32.totalorder %v55, %v181
    %vm190 = vcmp.eq.s32.totalorder %v56, %v181
    %vm191 = vcmp.eq.s32.totalorder %v57, %v181
    %vm192 = vcmp.eq.s32.totalorder %v58, %v181
    %vm193 = vcmp.eq.s32.totalorder %v55, %v184
    %vm194 = vcmp.eq.s32.totalorder %v56, %v184
    %vm195 = vcmp.eq.s32.totalorder %v57, %v184
    %vm196 = vcmp.eq.s32.totalorder %v58, %v184
    %v197 = vld [vmem:[#allocation4] sm:$0xff]
    %v198 = vld [vmem:[#allocation4 + $0x8] sm:$0xff]
    %v199 = vld [vmem:[#allocation4 + $0x10] sm:$0xff]
    %v200 = vsel %vm185, %v39, 0.0
    %v201 = vsel %vm186, %v40, 0.0
    %v202 = vsel %vm187, %v41, 0.0
    %v203 = vsel %vm188, %v42, 0.0
    %v204 = vsel %vm189, %v43, 0.0
    %v205 = vsel %vm190, %v44, 0.0
    %v206 = vsel %vm191, %v45, 0.0
    %v207 = vsel %vm192, %v46, 0.0
    %v208 = vsel %vm193, %v47, 0.0
    %v209 = vsel %vm194, %v48, 0.0
    %v210 = vsel %vm195, %v49, 0.0
    %v211 = vsel %vm196, %v50, 0.0
    %v212 = vadd.f32 %v200, %v201
    %v213 = vadd.f32 %v212, %v202
    %v214 = vadd.f32 %v213, %v203
    %215 = vadd.xlane.f32.xlu0 %v214
    %v216 = vpop.xlane.xlu0 %215
    %v217 = vadd.f32 %v204, %v205
    %v218 = vadd.f32 %v217, %v206
    %v219 = vadd.f32 %v218, %v207
    %220 = vadd.xlane.f32.xlu0 %v219
    %v221 = vpop.xlane.xlu0 %220
    %v222 = vadd.f32 %v208, %v209
    %v223 = vadd.f32 %v222, %v210
    %v224 = vadd.f32 %v223, %v211
    %225 = vadd.xlane.f32.xlu0 %v224
    %v226 = vpop.xlane.xlu0 %225
    %v227 = vadd.f32 %v197, %v216
    %v228 = vadd.f32 %v198, %v221
    %v229 = vadd.f32 %v199, %v226
    %230 = vst.msk [vmem:[#allocation4] sm:$0xff] %vm164, %v227
    %231 = vst.msk [vmem:[#allocation4 + $0x8] sm:$0xff] %vm164, %v228
    %232 = vst.msk [vmem:[#allocation4 + $0x10] sm:$0xff] %vm164, %v229
    // Predicated region
    $region18: #{tpu_custom_call.1} parent=1 // pred_check
      %p233 = pneg %p25
    $region19: #{tpu_custom_call.1} parent=1 // pred_check_branch
      %235 = sbr.rel (%p233) target = $region21
    $region20: #{tpu_custom_call.1} parent=1 // pred_region
      %v236 = vld [vmem:[#allocation2] sm:$0xff]
      %v237 = vld [vmem:[#allocation2 + $0x8] sm:$0xff]
      %v238 = vld [vmem:[#allocation2 + $0x10] sm:$0xff]
      %v239 = vld [vmem:[#allocation3] sm:$0xff]
      %v240 = vld [vmem:[#allocation3 + $0x8] sm:$0xff]
      %v241 = vld [vmem:[#allocation3 + $0x10] sm:$0xff]
      %v242 = vlog2.pop %v239
      %v243 = vmul.f32 %v242, 0.6931472
      %v244 = vlog2.pop %v240
      %v245 = vmul.f32 %v244, 0.6931472
      %v246 = vlog2.pop %v241
      %v247 = vmul.f32 %v246, 0.6931472
      %v248 = vadd.f32 %v236, %v243
      %v249 = vadd.f32 %v237, %v245
      %v250 = vadd.f32 %v238, %v247
      %v251 = vld [vmem:[#allocation4] sm:$0xff]
      %v252 = vld [vmem:[#allocation4 + $0x8] sm:$0xff]
      %v253 = vld [vmem:[#allocation4 + $0x10] sm:$0xff]
      %v254 = vsub.f32 %v248, %v251
      %v255 = vsub.f32 %v249, %v252
      %v256 = vsub.f32 %v250, %v253
      %vm257 = vcmp.ne.s32.totalorder %v51, 4294967196
      %vm258 = vcmp.ne.s32.totalorder %v52, 4294967196
      %vm259 = vcmp.ne.s32.totalorder %v53, 4294967196
      %v260 = vsel %vm257, %v254, 0.0
      %v261 = vsel %vm258, %v255, 0.0
      %v262 = vsel %vm259, %v256, 0.0
      %263 = vst.msk [vmem:[%s2] sm:$0xff] %vm164, %v260
      %264 = vst.msk [vmem:[%s2 + $0x8] sm:$0xff] %vm164, %v261
      %265 = vst.msk [vmem:[%s2 + $0x10] sm:$0xff] %vm164, %v262
    $region21: #{tpu_custom_call.1} parent=1 // pred_fallthru
      _
    // Predicated region
    $region22: #{tpu_custom_call.1} parent=1 // pred_check
      _
    $region23: #{tpu_custom_call.1} parent=1 // pred_check_branch
      %267 = sbr.rel (0) target = $region25
    $region24: #{tpu_custom_call.1} parent=1 // pred_region
      _
    $region25: #{tpu_custom_call.1} parent=1 // pred_fallthru
      _
    // Predicated region
    $region26: #{tpu_custom_call.1} parent=1 // pred_check
      _
    $region27: #{tpu_custom_call.1} parent=1 // pred_check_branch
      %269 = sbr.rel (0) target = $region29
    $region28: #{tpu_custom_call.1} parent=1 // pred_region
      _
    $region29: #{tpu_custom_call.1} parent=1 // pred_fallthru
      _
    %270 = vsyncpa [#allocation6], 1

</llo_original>
